<compile_context>
chip_gen: v7x
topology: tpu7x:2x2x1
jax: 0.10.0
libtpu: 0.0.40
codegen_flags: <defaults>
</compile_context>

<pallas_src>
import functools

import jax
import jax.numpy as jnp
from jax import lax
from jax.experimental import pallas as pl
from jax.experimental.pallas import tpu as pltpu


# ~3 MiB per (B, C, thw) block: pass 3 double-buffers 2 inputs + 1 output -> ~12 MiB
# residency, inside v5e's 16 MiB scoped-VMEM default and far inside v6e/v7x defaults.
_BLOCK_BYTES_TARGET = 3 * 1024 * 1024
# Whole-x-resident fused fast path threshold (f32 bytes of x).  Conservative so that
# x + gradient + output buffers stay well under the scoped VMEM limit on every gen.
_FUSED_X_BYTES_LIMIT = 2 * 1024 * 1024


def _pick_hw_tile(HW, B, C, itemsize, block_bytes):
    """HW (lane-axis) tile: full HW if the whole-row block is small, otherwise a
    multiple of 128 sized purely by bytes (no artificial lane cap)."""
    if B * C * HW * itemsize <= block_bytes:
        return HW
    thw = block_bytes // (B * C * itemsize)
    thw = max(128, (thw // 128) * 128)
    if thw >= HW:
        return HW
    return thw


# --------------------- fused fast path: stats + MLP + apply in one kernel ----------
def _fused_kernel(x_ref, w1_ref, w2_ref, o_ref, *, hw):
    x = x_ref[...]                                   # (B, C, HW), native dtype
    xf = x.astype(jnp.float32)
    g = xf[:, 1:, :] - xf[:, :-1, :]                 # (B, C-1, HW) raw spectral gradient

    row_sum = jnp.sum(g, axis=2)                     # (B, C-1)
    row_max = jnp.max(g, axis=2)
    row_min = jnp.min(g, axis=2)

    gmax = jnp.max(row_max, keepdims=True)           # (1, 1) global max of raw gradient
    gmin = jnp.min(row_min, keepdims=True)           # (1, 1) global min
    inv = 1.0 / (gmax - gmin + 1e-8)

    # Normalization is affine with positive scale -> apply to the pooled stats (exact).
    avg_n = (row_sum * (1.0 / hw) - gmin) * inv      # (B, C-1)
    max_n = (row_max - gmin) * inv

    w1 = w1_ref[...]                                 # (C, C-1) expansion-folded FC1 weight
    w2 = w2_ref[...]                                 # (C, C)   FC2 weight

    def fc(v):                                       # sigmoid(relu(v @ w1f.T) @ w2.T)
        h = lax.dot_general(v, w1, (((1,), (1,)), ((), ())),
                            preferred_element_type=jnp.float32)
        h = jnp.maximum(h, 0.0)
        o = lax.dot_general(h, w2, (((1,), (1,)), ((), ())),
                            preferred_element_type=jnp.float32)
        return jax.nn.sigmoid(o)

    attn = jax.nn.sigmoid(fc(avg_n) + fc(max_n))     # (B, C)
    o_ref[...] = (x * attn[:, :, None]).astype(o_ref.dtype)


# --------------------- pass 1: spectral-gradient pooled statistics -----------------
def _grad_stats_kernel(x_ref, sum_ref, max_ref, min_ref, *, hw, thw, nt, nt_inner):
    p = pl.program_id(0)                  # parallel HW split (megacore on v7x)
    t = pl.program_id(1)                  # sequential ("arbitrary") tiles within a split
    gt = p * nt_inner + t                 # global HW-tile index (index_map clamps reads)

    x = x_ref[...].astype(jnp.float32)    # (B, C, thw)
    g = x[:, 1:, :] - x[:, :-1, :]        # (B, C-1, thw) raw spectral gradient
    # NOTE: kept as sublane slices (proven lowering); pltpu.roll would save one small
    # VMEM copy but this pass is HBM-bound either way.

    @pl.when(t == 0)                      # resident per-split accumulators: init once
    def _():
        sum_ref[...] = jnp.zeros_like(sum_ref)
        max_ref[...] = jnp.full_like(max_ref, -jnp.inf)
        min_ref[...] = jnp.full_like(min_ref, jnp.inf)

    def _accum(g_s, g_mx, g_mn):
        sum_ref[0] = sum_ref[0] + jnp.sum(g_s, axis=2, keepdims=True)
        max_ref[0] = jnp.maximum(max_ref[0], jnp.max(g_mx, axis=2, keepdims=True))
        min_ref[0] = jnp.minimum(min_ref[0], jnp.min(g_mn, axis=2, keepdims=True))

    has_tail = (hw % thw) != 0
    if has_tail:
        # Hot path: full tiles carry no masking work at all.
        @pl.when(gt < nt - 1)
        def _():
            _accum(g, g, g)

        # Tail tile only: mask padded lanes (mask BEFORE the reductions - padded lanes
        # may hold stale-VMEM garbage).  Padded grid steps (gt >= nt) fall through.
        @pl.when(gt == nt - 1)
        def _():
            lane = lax.broadcasted_iota(jnp.int32, g.shape, 2)
            valid = (gt * thw + lane) < hw
            _accum(jnp.where(valid, g, 0.0),
                   jnp.where(valid, g, -jnp.inf),
                   jnp.where(valid, g, jnp.inf))
    else:
        @pl.when(gt < nt)                 # skip padded steps when nt is odd
        def _():
            _accum(g, g, g)


# --------------------- pass 3: channel re-weighting --------------------------------
def _apply_kernel(attn_ref, x_ref, o_ref):
    # attn block (B, C, 1) broadcasts over the thw lane axis of the x block (B, C, thw).
    o_ref[...] = (x_ref[...] * attn_ref[...]).astype(o_ref.dtype)


def spectral_attention(x, w1, w2, *, block_bytes=_BLOCK_BYTES_TARGET,
                       fused_bytes=_FUSED_X_BYTES_LIMIT):
    """x: (B, C, H, W), w1/w2: (C, C) squeezed bias-free 1x1-conv weights. Returns NCHW."""
    B, C, H, W = x.shape
    assert C >= 2, "SpectralAttention needs >= 2 spectral channels (gradient along C)."
    HW = H * W
    dtype = x.dtype
    x3 = x.reshape(B, C, HW)              # native dtype; no extra HBM cast pass
    itemsize = jnp.dtype(dtype).itemsize

    # Fold the "duplicate last gradient channel" expansion into the first FC weight:
    #   v_expanded @ w1.T  ==  v_short @ w1f.T   with   w1f = w1[:, :C-1], col C-2 += col C-1
    w1 = w1.astype(jnp.float32)
    w2 = w2.astype(jnp.float32)
    w1f = w1[:, :C - 1].at[:, C - 2].add(w1[:, C - 1])          # (C, C-1)

    # ---------------- fused fast path: whole x resident in VMEM --------------------
    if B * C * HW * 4 <= fused_bytes:
        out = pl.pallas_call(
            functools.partial(_fused_kernel, hw=HW),
            grid=(1,),
            in_specs=[
                pl.BlockSpec((B, C, HW), lambda i: (0, 0, 0)),
                pl.BlockSpec((C, C - 1), lambda i: (0, 0)),
                pl.BlockSpec((C, C), lambda i: (0, 0)),
            ],
            out_specs=pl.BlockSpec((B, C, HW), lambda i: (0, 0, 0)),
            out_shape=jax.ShapeDtypeStruct((B, C, HW), dtype),
            compiler_params=pltpu.CompilerParams(
                dimension_semantics=("arbitrary",),
                vmem_limit_bytes=32 * 1024 * 1024),
        )(x3, w1f, w2)
        return out.reshape(B, C, H, W)

    # ---------------- streaming path for large images ------------------------------
    thw = _pick_hw_tile(HW, B, C, itemsize, block_bytes)
    nt = pl.cdiv(HW, thw)                 # total HW tiles
    P = 2 if nt >= 2 else 1               # outer parallel split (both v7x TensorCores)
    nt_inner = pl.cdiv(nt, P)

    # pass 1: per-(batch, channel) pooled stats of the raw gradient, P partial copies.
    sums_p, maxs_p, mins_p = pl.pallas_call(
        functools.partial(_grad_stats_kernel, hw=HW, thw=thw, nt=nt, nt_inner=nt_inner),
        grid=(P, nt_inner),
        in_specs=[pl.BlockSpec(
            (B, C, thw),
            lambda p, t: (0, 0, jnp.minimum(p * nt_inner + t, nt - 1)))],
        out_specs=[
            pl.BlockSpec((1, B, C - 1, 1), lambda p, t: (p, 0, 0, 0)),
            pl.BlockSpec((1, B, C - 1, 1), lambda p, t: (p, 0, 0, 0)),
            pl.BlockSpec((1, B, C - 1, 1), lambda p, t: (p, 0, 0, 0)),
        ],
        out_shape=[
            jax.ShapeDtypeStruct((P, B, C - 1, 1), jnp.float32),
            jax.ShapeDtypeStruct((P, B, C - 1, 1), jnp.float32),
            jax.ShapeDtypeStruct((P, B, C - 1, 1), jnp.float32),
        ],
        compiler_params=pltpu.CompilerParams(
            dimension_semantics=("parallel", "arbitrary")),
        cost_estimate=pl.CostEstimate(
            flops=4 * B * (C - 1) * HW, transcendentals=0,
            bytes_accessed=B * C * HW * itemsize),
    )(x3)

    # ---- O(B*C) glue: combine per-core partials, normalize, tiny MLP (plain JAX) ---
    sums = jnp.sum(sums_p, axis=0)[..., 0]            # (B, C-1)
    maxs = jnp.max(maxs_p, axis=0)[..., 0]
    mins = jnp.min(mins_p, axis=0)[..., 0]
    gmin = jnp.min(mins)                              # global min / max of raw gradient
    gmax = jnp.max(maxs)
    inv = 1.0 / (gmax - gmin + 1e-8)
    avg_n = (sums / HW - gmin) * inv                  # pooled stats of normalized gradient
    max_n = (maxs - gmin) * inv

    def fc(v):                                        # (B, C-1) -> (B, C)
        return jax.nn.sigmoid(jnp.maximum(v @ w1f.T, 0.0) @ w2.T)

    attn = jax.nn.sigmoid(fc(avg_n) + fc(max_n))      # (B, C) f32

    # pass 3: broadcast channel re-weighting (HBM-bound, HW axis fully parallel).
    # (pipeline_mode=pl.Buffered(3) on the x in_spec is a further v7x knob if DMA shows
    #  up exposed; default double-buffering already hits the roofline at ~3 MiB blocks.)
    out = pl.pallas_call(
        _apply_kernel,
        grid=(nt,),
        in_specs=[
            pl.BlockSpec((B, C, 1), lambda t: (0, 0, 0)),
            pl.BlockSpec((B, C, thw), lambda t: (0, 0, t)),
        ],
        out_specs=pl.BlockSpec((B, C, thw), lambda t: (0, 0, t)),
        out_shape=jax.ShapeDtypeStruct((B, C, HW), dtype),
        compiler_params=pltpu.CompilerParams(dimension_semantics=("parallel",)),
        cost_estimate=pl.CostEstimate(
            flops=B * C * HW, transcendentals=0,
            bytes_accessed=2 * B * C * HW * itemsize),
    )(attn[:, :, None], x3)

    return out.reshape(B, C, H, W)


# ---------------- Pure-JAX reference (mirrors the PyTorch forward) -----------------
def _reference(x, w1, w2):
    g = x[:, 1:] - x[:, :-1]
    gn = (g - g.min()) / (g.max() - g.min() + 1e-8)
    ge = jnp.concatenate([gn, gn[:, -1:]], axis=1)
    avg = ge.mean(axis=(2, 3))                        # (B, C)
    mx = ge.max(axis=(2, 3))                          # (B, C)

    def fc(v):
        h = jnp.maximum(v @ w1.T, 0.0)
        return jax.nn.sigmoid(h @ w2.T)

    attn = jax.nn.sigmoid(fc(avg) + fc(mx))           # (B, C)
    return x * attn[:, :, None, None]


if __name__ == "__main__":
    key = jax.random.PRNGKey(0)
    kx, k1, k2, kx2 = jax.random.split(key, 4)

    # ---- test 1: small input -> fused single-kernel fast path ---------------------
    B, C, H, W = 2, 4, 16, 16
    x = jax.random.normal(kx, (B, C, H, W), dtype=jnp.float32)
    w1 = jax.random.normal(k1, (C, C), dtype=jnp.float32) * 0.5
    w2 = jax.random.normal(k2, (C, C), dtype=jnp.float32) * 0.5

    out = jax.block_until_ready(spectral_attention(x, w1, w2))
    ref = _reference(x, w1, w2)
    assert out.shape == (B, C, H, W)
    assert jnp.allclose(out, ref, atol=1e-3, rtol=1e-3), float(jnp.max(jnp.abs(out - ref)))

    # ---- test 2: force the streaming (tiled, P-split, tail-masked) path -----------
    H2 = W2 = 18                                      # HW=324: 3 tiles of 128 + tail
    x2 = jax.random.normal(kx2, (B, C, H2, W2), dtype=jnp.float32)
    out2 = jax.block_until_ready(
        spectral_attention(x2, w1, w2, block_bytes=4096, fused_bytes=0))
    ref2 = _reference(x2, w1, w2)
    assert out2.shape == (B, C, H2, W2)
    assert jnp.allclose(out2, ref2, atol=1e-3, rtol=1e-3), float(jnp.max(jnp.abs(out2 - ref2)))

    print("KERNEL_OK")
</pallas_src>

<mosaic_0001>
module attributes {stable_mosaic.version = 11 : i64} {
  func.func @_fused_kernel(%arg0: i32, %arg1: memref<2x4x256xf32, #tpu.memory_space<vmem>>, %arg2: memref<4x3xf32, #tpu.memory_space<vmem>>, %arg3: memref<4x4xf32, #tpu.memory_space<vmem>>, %arg4: memref<2x4x256xf32, #tpu.memory_space<vmem>>) attributes {dimension_semantics = [#tpu.dimension_semantics<arbitrary>], iteration_bounds = array<i64: 1>, scalar_prefetch = 0 : i64, scratch_operands = 0 : i64, tpu.core_type = #tpu.core_type<tc>, window_params = [{pipeline_mode = #tpu.pipeline_mode<synchronous>, transform_indices = @transform_0, window_bounds = array<i64: 2, 4, 256>}, {pipeline_mode = #tpu.pipeline_mode<synchronous>, transform_indices = @transform_1, window_bounds = array<i64: 4, 3>}, {pipeline_mode = #tpu.pipeline_mode<synchronous>, transform_indices = @transform_2, window_bounds = array<i64: 4, 4>}, {pipeline_mode = #tpu.pipeline_mode<synchronous>, transform_indices = @transform_3, window_bounds = array<i64: 2, 4, 256>}]} {
    %c0 = arith.constant 0 : index
    %c0_0 = arith.constant 0 : index
    %c0_1 = arith.constant 0 : index
    %0 = vector.load %arg1[%c0, %c0_0, %c0_1] : memref<2x4x256xf32, #tpu.memory_space<vmem>>, vector<2x4x256xf32>
    %1 = vector.extract_strided_slice %0 {offsets = [0, 1, 0], sizes = [2, 3, 256], strides = [1, 1, 1]} : vector<2x4x256xf32> to vector<2x3x256xf32>
    %2 = vector.extract_strided_slice %0 {offsets = [0, 0, 0], sizes = [2, 3, 256], strides = [1, 1, 1]} : vector<2x4x256xf32> to vector<2x3x256xf32>
    %3 = arith.subf %1, %2 : vector<2x3x256xf32>
    %cst = arith.constant dense<0.000000e+00> : vector<2x3xf32>
    %4 = vector.multi_reduction <add>, %3, %cst [2] : vector<2x3x256xf32> to vector<2x3xf32>
    %cst_2 = arith.constant dense<0xFF800000> : vector<2x3xf32>
    %5 = vector.multi_reduction <maximumf>, %3, %cst_2 [2] : vector<2x3x256xf32> to vector<2x3xf32>
    %cst_3 = arith.constant dense<0x7F800000> : vector<2x3xf32>
    %6 = vector.multi_reduction <minimumf>, %3, %cst_3 [2] : vector<2x3x256xf32> to vector<2x3xf32>
    %7 = vector.shape_cast %5 : vector<2x3xf32> to vector<1x2x3xf32>
    %cst_4 = arith.constant dense<0xFF800000> : vector<1xf32>
    %8 = vector.multi_reduction <maximumf>, %7, %cst_4 [1, 2] : vector<1x2x3xf32> to vector<1xf32>
    %9 = vector.shape_cast %8 : vector<1xf32> to vector<1x1x1xf32>
    %10 = vector.extract %9[0, 0, 0] : f32 from vector<1x1x1xf32>
    %11 = vector.broadcast %10 : f32 to vector<1x1xf32>
    %12 = vector.shape_cast %6 : vector<2x3xf32> to vector<1x2x3xf32>
    %cst_5 = arith.constant dense<0x7F800000> : vector<1xf32>
    %13 = vector.multi_reduction <minimumf>, %12, %cst_5 [1, 2] : vector<1x2x3xf32> to vector<1xf32>
    %14 = vector.shape_cast %13 : vector<1xf32> to vector<1x1x1xf32>
    %15 = vector.extract %14[0, 0, 0] : f32 from vector<1x1x1xf32>
    %16 = vector.broadcast %15 : f32 to vector<1x1xf32>
    %17 = arith.subf %11, %16 : vector<1x1xf32>
    %cst_6 = arith.constant 9.99999993E-9 : f32
    %18 = vector.broadcast %cst_6 : f32 to vector<1x1xf32>
    %19 = arith.addf %17, %18 : vector<1x1xf32>
    %cst_7 = arith.constant 1.000000e+00 : f32
    %20 = vector.broadcast %cst_7 : f32 to vector<1x1xf32>
    %21 = arith.divf %20, %19 : vector<1x1xf32>
    %cst_8 = arith.constant 3.906250e-03 : f32
    %22 = vector.broadcast %cst_8 : f32 to vector<2x3xf32>
    %23 = arith.mulf %4, %22 : vector<2x3xf32>
    %24 = vector.broadcast %16 : vector<1x1xf32> to vector<2x3xf32>
    %25 = arith.subf %23, %24 : vector<2x3xf32>
    %26 = vector.broadcast %21 : vector<1x1xf32> to vector<2x3xf32>
    %27 = arith.mulf %25, %26 : vector<2x3xf32>
    %28 = vector.broadcast %16 : vector<1x1xf32> to vector<2x3xf32>
    %29 = arith.subf %5, %28 : vector<2x3xf32>
    %30 = vector.broadcast %21 : vector<1x1xf32> to vector<2x3xf32>
    %31 = arith.mulf %29, %30 : vector<2x3xf32>
    %c0_9 = arith.constant 0 : index
    %c0_10 = arith.constant 0 : index
    %32 = vector.load %arg2[%c0_9, %c0_10] : memref<4x3xf32, #tpu.memory_space<vmem>>, vector<4x3xf32>
    %c0_11 = arith.constant 0 : index
    %c0_12 = arith.constant 0 : index
    %33 = vector.load %arg3[%c0_11, %c0_12] : memref<4x4xf32, #tpu.memory_space<vmem>>, vector<4x4xf32>
    %cst_13 = arith.constant dense<0.000000e+00> : vector<2x4xf32>
    %34 = tpu.matmul %27, %32, %cst_13 {dimension_numbers = #tpu.dot_dimension_numbers<[1], [1], [0], [0], [0, 0, 1, 0], [], []>} : vector<2x3xf32>, vector<4x3xf32>, vector<2x4xf32> -> vector<2x4xf32>
    %cst_14 = arith.constant 0.000000e+00 : f32
    %35 = vector.broadcast %cst_14 : f32 to vector<2x4xf32>
    %36 = arith.maximumf %34, %35 : vector<2x4xf32>
    %cst_15 = arith.constant dense<0.000000e+00> : vector<2x4xf32>
    %37 = tpu.matmul %36, %33, %cst_15 {dimension_numbers = #tpu.dot_dimension_numbers<[1], [1], [0], [0], [0, 0, 1, 0], [], []>} : vector<2x4xf32>, vector<4x4xf32>, vector<2x4xf32> -> vector<2x4xf32>
    %38 = arith.negf %37 : vector<2x4xf32>
    %39 = math.exp %38 : vector<2x4xf32>
    %cst_16 = arith.constant 1.000000e+00 : f32
    %40 = vector.broadcast %cst_16 : f32 to vector<2x4xf32>
    %41 = arith.addf %40, %39 : vector<2x4xf32>
    %42 = arith.divf %40, %41 : vector<2x4xf32>
    %cst_17 = arith.constant dense<0.000000e+00> : vector<2x4xf32>
    %43 = tpu.matmul %31, %32, %cst_17 {dimension_numbers = #tpu.dot_dimension_numbers<[1], [1], [0], [0], [0, 0, 1, 0], [], []>} : vector<2x3xf32>, vector<4x3xf32>, vector<2x4xf32> -> vector<2x4xf32>
    %cst_18 = arith.constant 0.000000e+00 : f32
    %44 = vector.broadcast %cst_18 : f32 to vector<2x4xf32>
    %45 = arith.maximumf %43, %44 : vector<2x4xf32>
    %cst_19 = arith.constant dense<0.000000e+00> : vector<2x4xf32>
    %46 = tpu.matmul %45, %33, %cst_19 {dimension_numbers = #tpu.dot_dimension_numbers<[1], [1], [0], [0], [0, 0, 1, 0], [], []>} : vector<2x4xf32>, vector<4x4xf32>, vector<2x4xf32> -> vector<2x4xf32>
    %47 = arith.negf %46 : vector<2x4xf32>
    %48 = math.exp %47 : vector<2x4xf32>
    %cst_20 = arith.constant 1.000000e+00 : f32
    %49 = vector.broadcast %cst_20 : f32 to vector<2x4xf32>
    %50 = arith.addf %49, %48 : vector<2x4xf32>
    %51 = arith.divf %49, %50 : vector<2x4xf32>
    %52 = arith.addf %42, %51 : vector<2x4xf32>
    %53 = arith.negf %52 : vector<2x4xf32>
    %54 = math.exp %53 : vector<2x4xf32>
    %cst_21 = arith.constant 1.000000e+00 : f32
    %55 = vector.broadcast %cst_21 : f32 to vector<2x4xf32>
    %56 = arith.addf %55, %54 : vector<2x4xf32>
    %57 = arith.divf %55, %56 : vector<2x4xf32>
    %58 = vector.shape_cast %57 : vector<2x4xf32> to vector<2x4x1xf32>
    %59 = vector.broadcast %58 : vector<2x4x1xf32> to vector<2x4x256xf32>
    %60 = arith.mulf %0, %59 : vector<2x4x256xf32>
    %c0_22 = arith.constant 0 : index
    %c0_23 = arith.constant 0 : index
    %c0_24 = arith.constant 0 : index
    %61 = vector.load %arg4[%c0_22, %c0_23, %c0_24] : memref<2x4x256xf32, #tpu.memory_space<vmem>>, vector<2x4x256xf32>
    tpu.vector_store %arg4[%c0_22, %c0_23, %c0_24], %60 {strides = array<i32>} : memref<2x4x256xf32, #tpu.memory_space<vmem>>, vector<2x4x256xf32>,
    return
  }
  func.func @transform_0(%arg0: i32) -> (i32, i32, i32) {
    %c0_i32 = arith.constant 0 : i32
    %c0_i32_0 = arith.constant 0 : i32
    %c0_i32_1 = arith.constant 0 : i32
    %c0_i32_2 = arith.constant 0 : i32
    return %c0_i32, %c0_i32_0, %c0_i32_1 : i32, i32, i32
  }
  func.func @transform_1(%arg0: i32) -> (i32, i32) {
    %c0_i32 = arith.constant 0 : i32
    %c0_i32_0 = arith.constant 0 : i32
    %c0_i32_1 = arith.constant 0 : i32
    return %c0_i32, %c0_i32_0 : i32, i32
  }
  func.func @transform_2(%arg0: i32) -> (i32, i32) {
    %c0_i32 = arith.constant 0 : i32
    %c0_i32_0 = arith.constant 0 : i32
    %c0_i32_1 = arith.constant 0 : i32
    return %c0_i32, %c0_i32_0 : i32, i32
  }
  func.func @transform_3(%arg0: i32) -> (i32, i32, i32) {
    %c0_i32 = arith.constant 0 : i32
    %c0_i32_0 = arith.constant 0 : i32
    %c0_i32_1 = arith.constant 0 : i32
    %c0_i32_2 = arith.constant 0 : i32
    return %c0_i32, %c0_i32_0, %c0_i32_1 : i32, i32, i32
  }
}

</mosaic_0001>

<llo_original>
// kernel: tpu_custom_call.1
$region0: #{tpu_custom_call.1}
  #allocation0 [shape = 'u32[]', space=smem, size = 0x4, offset = 0x4, fixed_abs, tag = 'smem constant byte address 0x4 - core index']
  #allocation1 [shape = 'u32[144,128]{1,0:T(1,128)}', space=vmem, size = 0x12000, scoped, tag = 'internal scratch']
  %s0 = inlined_call_operand.hbm [shape: f32[2,4,256], index: 0, kind: input, shape index: {}]
  %s1 = inlined_call_operand.hbm [shape: f32[4,3], index: 1, kind: input, shape index: {}]
  %s2 = inlined_call_operand.vmem [shape: f32[4,4], index: 2, kind: input, shape index: {}]
  %s3 = inlined_call_operand.hbm [shape: f32[2,4,256], index: 3, kind: output, shape index: {}]
  %s4 = sld [smem:[#allocation0]]
  $region30: #{tpu_custom_call.1} parent=0
    _
  %s6 = ssub.s32 1, %s4
  %s7 = scalar_select 0, %s6, %s4
  $region1: #{tpu_custom_call.1} parent=0
    #allocation2 [shape = 'u8[8192]{0}', space=vmem, size = 0x2000, scoped, tag = 'input window, operand 0, single buffered']
    #allocation3 [shape = 's32[1]{0}', space=sflag, size = 0x4, scoped, tag = 'scoped memory for tpu_custom_call.1']
    #allocation4 [shape = 's32[1]{0}', space=sflag, size = 0x4, scoped, tag = 'scoped memory for tpu_custom_call.1']
    #allocation5 [shape = 'u8[2048]{0}', space=vmem, size = 0x800, scoped, tag = 'input window, operand 1, single buffered']
    #allocation6 [shape = 's32[1]{0}', space=sflag, size = 0x4, scoped, tag = 'scoped memory for tpu_custom_call.1']
    #allocation7 [shape = 'u8[8192]{0}', space=vmem, size = 0x2000, scoped, tag = 'output window, operand 0, single buffered']
    %8 = vsyncpa [#allocation3], 0
    %9 = vsyncpa [#allocation6], 0
    %10 = vsyncpa [#allocation4], 0
    // Predicated region
    $region2: #{tpu_custom_call.1} parent=1 // pred_check
      _
    $region3: #{tpu_custom_call.1} parent=1 // pred_check_branch
      %12 = sbr.rel (0) target = $region5
    $region4: #{tpu_custom_call.1} parent=1 // pred_region
      %s14 = ssub.s32 256, 256
      %15 = vsyncadd [#allocation3], %s14
      %s16 = sshll.u32 [#allocation2], 4
      %s17 = int_to_ptr.vmem [resolvable:$true] %s16
      %22 = dma.hbm_to_vmem [thread:$0]  %s0, 256, %s17, [#allocation3], 128, 128, 8
    $region5: #{tpu_custom_call.1} parent=1 // pred_fallthru
      _
    // Predicated region
    $region6: #{tpu_custom_call.1} parent=1 // pred_check
      _
    $region7: #{tpu_custom_call.1} parent=1 // pred_check_branch
      %24 = sbr.rel (0) target = $region9
    $region8: #{tpu_custom_call.1} parent=1 // pred_region
      %s26 = ssub.s32 64, 64
      %27 = vsyncadd [#allocation6], %s26
      %s29 = sshll.u32 [#allocation5], 4
      %s30 = int_to_ptr.vmem [resolvable:$true] %s29
      %32 = dma.hbm_to_vmem [thread:$0]  %s1, 64, %s30, [#allocation6]
    $region9: #{tpu_custom_call.1} parent=1 // pred_fallthru
      _
    // Predicated region
    $region10: #{tpu_custom_call.1} parent=1 // pred_check
      _
    $region11: #{tpu_custom_call.1} parent=1 // pred_check_branch
      %34 = sbr.rel (0) target = $region13
    $region12: #{tpu_custom_call.1} parent=1 // pred_region
      _
    $region13: #{tpu_custom_call.1} parent=1 // pred_fallthru
      _
    // Predicated region
    $region14: #{tpu_custom_call.1} parent=1 // pred_check
      _
    $region15: #{tpu_custom_call.1} parent=1 // pred_check_branch
      %36 = sbr.rel (0) target = $region17
    $region16: #{tpu_custom_call.1} parent=1 // pred_region
      %37 = dma.done [#allocation3], 256
    $region17: #{tpu_custom_call.1} parent=1 // pred_fallthru
      _
    // Predicated region
    $region18: #{tpu_custom_call.1} parent=1 // pred_check
      _
    $region19: #{tpu_custom_call.1} parent=1 // pred_check_branch
      %39 = sbr.rel (0) target = $region21
    $region20: #{tpu_custom_call.1} parent=1 // pred_region
      %40 = dma.done [#allocation6], 64
    $region21: #{tpu_custom_call.1} parent=1 // pred_fallthru
      _
    %v41 = vld [vmem:[#allocation2] sm:$0xff]
    %v42 = vld [vmem:[#allocation2 + $0x8] sm:$0xff]
    %v45 = vrot.slane %v41, 7
    %v46 = vrot.slane %v42, 7
    %v49 = vsub.f32 %v41, %v45
    %v50 = vsub.f32 %v42, %v46
    %v53 = vcombine.high %v49, %v49
    %v54 = vcombine.high %v50, %v50
    %vm57 = vcmask 1043457
    %v58 = vsel %vm57, %v49, 0.0
    %v59 = vsel %vm57, %v53, 0.0
    %v60 = vadd.f32 %v58, %v59
    %61 = vadd.xlane.f32.xlu0 %v60
    %v62 = vpop.xlane.xlu0 %61
    %v63 = vsel %vm57, %v50, 0.0
    %v64 = vsel %vm57, %v54, 0.0
    %v65 = vadd.f32 %v63, %v64
    %66 = vadd.xlane.f32.xlu0 %v65
    %v67 = vpop.xlane.xlu0 %66
    %v68 = vsel %vm57, %v49, -inf
    %v69 = vsel %vm57, %v53, -inf
    %v70 = vmax.f32 %v68, %v69
    %71 = vmax.xlane.f32.xlu0 %v70
    %v72 = vpop.xlane.xlu0 %71
    %v73 = vsel %vm57, %v50, -inf
    %v74 = vsel %vm57, %v54, -inf
    %v75 = vmax.f32 %v73, %v74
    %76 = vmax.xlane.f32.xlu0 %v75
    %v77 = vpop.xlane.xlu0 %76
    %v78 = vsel %vm57, %v49, inf
    %v79 = vsel %vm57, %v53, inf
    %v80 = vmin.f32 %v78, %v79
    %81 = vmin.xlane.f32.xlu0 %v80
    %v82 = vpop.xlane.xlu0 %81
    %v83 = vsel %vm57, %v50, inf
    %v84 = vsel %vm57, %v54, inf
    %v85 = vmin.f32 %v83, %v84
    %86 = vmin.xlane.f32.xlu0 %v85
    %v87 = vpop.xlane.xlu0 %86
    %v88 = vsel %vm57, %v72, -inf
    %v89 = vsel %vm57, %v77, -inf
    %v90 = vmax.f32 %v88, %v89
    %v91 = vrot.slane %v90, 4
    %v92 = vmax.f32 %v90, %v91
    %v93 = vrot.slane %v92, 2
    %v94 = vmax.f32 %v92, %v93
    %v95 = vrot.slane %v94, 1
    %v96 = vmax.f32 %v94, %v95
    %s97 = vtos %v96
    %v98 = vstv %s97
    %v99 = vsel %vm57, %v82, inf
    %v100 = vsel %vm57, %v87, inf
    %v101 = vmin.f32 %v99, %v100
    %v102 = vrot.slane %v101, 4
    %v103 = vmin.f32 %v101, %v102
    %v104 = vrot.slane %v103, 2
    %v105 = vmin.f32 %v103, %v104
    %v106 = vrot.slane %v105, 1
    %v107 = vmin.f32 %v105, %v106
    %s108 = vtos %v107
    %v109 = vstv %s108
    %v110 = vsub.f32 %v98, %v109
    %v111 = vadd.f32 %v110, 1e-08
    %v112 = vrcp.pop %v111
    %v113 = vmul.f32 1.0, %v112
    %v114 = vmul.f32 %v62, 0.00390625
    %v115 = vmul.f32 %v67, 0.00390625
    %v116 = vsub.f32 %v114, %v109
    %v117 = vsub.f32 %v115, %v109
    %v118 = vmul.f32 %v116, %v113
    %v119 = vmul.f32 %v117, %v113
    %v120 = vsub.f32 %v72, %v109
    %v121 = vsub.f32 %v77, %v109
    %v122 = vmul.f32 %v120, %v113
    %v123 = vmul.f32 %v121, %v113
    %v124 = vld [vmem:[#allocation5] sm:$0xf]
    %v125 = vld [vmem:[%s2] sm:$0xf]
    %v128 = vlaneseq
    %v129 = vand.u32 %v128, 127
    %v130 = vadd.s32 %v129, 1
    %v131 = vlaneseq
    %v132 = vshrl.u32 %v131, 7
    %v133 = vsub.s32 %v130, %v132
    %v134 = vrot.slane %v118, %v133
    %v135 = vlaneseq
    %v136 = vshrl.u32 %v135, 7
    %v137 = vsub.s32 %v130, %v136
    %v138 = vrot.slane %v119, %v137
    %vm139 = vcmask 1041409
    %v140 = vsel %vm139, %v138, %v134
    %vm141 = vcmask 23552
    %v142 = vsel %vm141, %v140, 0
    %v145 = vsel %vm141, %v124, 0
    %147 = vmatprep.subr.mxu0 0.0
    %148 = vmatpush1.xpose.msra.mxu0 %v145
    %149 = vmatprep.subr.mxu0 0.0
    %150 = vmatpush1.xpose.msra.mxu0 0.0
    %151 = vmatprep.subr.mxu0 0.0
    %152 = vmatpush1.xpose.msra.mxu0 0.0
    %153 = vmatprep.subr.mxu0 0.0
    %154 = vmatpush1.xpose.msra.mxu0 0.0
    %155 = vmatprep.subr.mxu0 0.0
    %156 = vmatpush1.xpose.msra.mxu0 0.0
    %157 = vmatprep.subr.mxu0 0.0
    %158 = vmatpush1.xpose.msra.mxu0 0.0
    %159 = vmatprep.subr.mxu0 0.0
    %160 = vmatpush1.xpose.msra.mxu0 0.0
    %161 = vmatprep.subr.mxu0 0.0
    %162 = vmatpush1.xpose.msra.mxu0 0.0
    %163 = vmatprep.subr.mxu0 0.0
    %164 = vmatpush1.xpose.msra.mxu0 0.0
    %165 = vmatprep.subr.mxu0 0.0
    %166 = vmatpush1.xpose.msra.mxu0 0.0
    %167 = vmatprep.subr.mxu0 0.0
    %168 = vmatpush1.xpose.msra.mxu0 0.0
    %169 = vmatprep.subr.mxu0 0.0
    %170 = vmatpush1.xpose.msra.mxu0 0.0
    %171 = vmatprep.subr.mxu0 0.0
    %172 = vmatpush1.xpose.msra.mxu0 0.0
    %173 = vmatprep.subr.mxu0 0.0
    %174 = vmatpush1.xpose.msra.mxu0 0.0
    %175 = vmatprep.subr.mxu0 0.0
    %176 = vmatpush1.xpose.msra.mxu0 0.0
    %177 = vmatprep.subr.mxu0 0.0
    %178 = vmatpush1.xpose.msra.mxu0 0.0
    %179 = vmatprep.subr.mxu0 0.0
    %180 = vmatpush1.xpose.msra.mxu0 0.0
    %181 = vmatprep.subr.mxu0 0.0
    %182 = vmatpush1.xpose.msra.mxu0 0.0
    %183 = vmatprep.subr.mxu0 0.0
    %184 = vmatpush1.xpose.msra.mxu0 0.0
    %185 = vmatprep.subr.mxu0 0.0
    %186 = vmatpush1.xpose.msra.mxu0 0.0
    %187 = vmatprep.subr.mxu0 0.0
    %188 = vmatpush1.xpose.msra.mxu0 0.0
    %189 = vmatprep.subr.mxu0 0.0
    %190 = vmatpush1.xpose.msra.mxu0 0.0
    %191 = vmatprep.subr.mxu0 0.0
    %192 = vmatpush1.xpose.msra.mxu0 0.0
    %193 = vmatprep.subr.mxu0 0.0
    %194 = vmatpush1.xpose.msra.mxu0 0.0
    %195 = vmatprep.subr.mxu0 0.0
    %196 = vmatpush1.xpose.msra.mxu0 0.0
    %197 = vmatprep.subr.mxu0 0.0
    %198 = vmatpush1.xpose.msra.mxu0 0.0
    %199 = vmatprep.subr.mxu0 0.0
    %200 = vmatpush1.xpose.msra.mxu0 0.0
    %201 = vmatprep.subr.mxu0 0.0
    %202 = vmatpush1.xpose.msra.mxu0 0.0
    %203 = vmatprep.subr.mxu0 0.0
    %204 = vmatpush1.xpose.msra.mxu0 0.0
    %205 = vmatprep.subr.mxu0 0.0
    %206 = vmatpush1.xpose.msra.mxu0 0.0
    %207 = vmatprep.subr.mxu0 0.0
    %208 = vmatpush1.xpose.msra.mxu0 0.0
    %209 = vmatprep.subr.mxu0 0.0
    %210 = vmatpush1.xpose.msra.mxu0 0.0
    %211 = vmatprep.mubr.f32.mxu0 0.0
    %212 = vmatmul.mubr.f32.gmra.mrb[0].mxu0 %v142
    %v213 = vpop.f32.mrb[0].mxu0
    %v214 = vadd.f32 0.0, %v213
    %v215 = vpop.f32.mrb[0].mxu0
    %216 = vdwg.mxu0
    %v217 = vmax.f32 %v214, 0.0
    %vm218 = vcmask 31744
    %v220 = vsel %vm218, %v217, 0
    %v223 = vsel %vm218, %v125, 0
    %225 = vmatprep.subr.mxu0 0.0
    %226 = vmatpush1.xpose.msra.mxu0 %v223
    %227 = vmatprep.subr.mxu0 0.0
    %228 = vmatpush1.xpose.msra.mxu0 0.0
    %229 = vmatprep.subr.mxu0 0.0
    %230 = vmatpush1.xpose.msra.mxu0 0.0
    %231 = vmatprep.subr.mxu0 0.0
    %232 = vmatpush1.xpose.msra.mxu0 0.0
    %233 = vmatprep.subr.mxu0 0.0
    %234 = vmatpush1.xpose.msra.mxu0 0.0
    %235 = vmatprep.subr.mxu0 0.0
    %236 = vmatpush1.xpose.msra.mxu0 0.0
    %237 = vmatprep.subr.mxu0 0.0
    %238 = vmatpush1.xpose.msra.mxu0 0.0
    %239 = vmatprep.subr.mxu0 0.0
    %240 = vmatpush1.xpose.msra.mxu0 0.0
    %241 = vmatprep.subr.mxu0 0.0
    %242 = vmatpush1.xpose.msra.mxu0 0.0
    %243 = vmatprep.subr.mxu0 0.0
    %244 = vmatpush1.xpose.msra.mxu0 0.0
    %245 = vmatprep.subr.mxu0 0.0
    %246 = vmatpush1.xpose.msra.mxu0 0.0
    %247 = vmatprep.subr.mxu0 0.0
    %248 = vmatpush1.xpose.msra.mxu0 0.0
    %249 = vmatprep.subr.mxu0 0.0
    %250 = vmatpush1.xpose.msra.mxu0 0.0
    %251 = vmatprep.subr.mxu0 0.0
    %252 = vmatpush1.xpose.msra.mxu0 0.0
    %253 = vmatprep.subr.mxu0 0.0
    %254 = vmatpush1.xpose.msra.mxu0 0.0
    %255 = vmatprep.subr.mxu0 0.0
    %256 = vmatpush1.xpose.msra.mxu0 0.0
    %257 = vmatprep.subr.mxu0 0.0
    %258 = vmatpush1.xpose.msra.mxu0 0.0
    %259 = vmatprep.subr.mxu0 0.0
    %260 = vmatpush1.xpose.msra.mxu0 0.0
    %261 = vmatprep.subr.mxu0 0.0
    %262 = vmatpush1.xpose.msra.mxu0 0.0
    %263 = vmatprep.subr.mxu0 0.0
    %264 = vmatpush1.xpose.msra.mxu0 0.0
    %265 = vmatprep.subr.mxu0 0.0
    %266 = vmatpush1.xpose.msra.mxu0 0.0
    %267 = vmatprep.subr.mxu0 0.0
    %268 = vmatpush1.xpose.msra.mxu0 0.0
    %269 = vmatprep.subr.mxu0 0.0
    %270 = vmatpush1.xpose.msra.mxu0 0.0
    %271 = vmatprep.subr.mxu0 0.0
    %272 = vmatpush1.xpose.msra.mxu0 0.0
    %273 = vmatprep.subr.mxu0 0.0
    %274 = vmatpush1.xpose.msra.mxu0 0.0
    %275 = vmatprep.subr.mxu0 0.0
    %276 = vmatpush1.xpose.msra.mxu0 0.0
    %277 = vmatprep.subr.mxu0 0.0
    %278 = vmatpush1.xpose.msra.mxu0 0.0
    %279 = vmatprep.subr.mxu0 0.0
    %280 = vmatpush1.xpose.msra.mxu0 0.0
    %281 = vmatprep.subr.mxu0 0.0
    %282 = vmatpush1.xpose.msra.mxu0 0.0
    %283 = vmatprep.subr.mxu0 0.0
    %284 = vmatpush1.xpose.msra.mxu0 0.0
    %285 = vmatprep.subr.mxu0 0.0
    %286 = vmatpush1.xpose.msra.mxu0 0.0
    %287 = vmatprep.subr.mxu0 0.0
    %288 = vmatpush1.xpose.msra.mxu0 0.0
    %289 = vmatprep.mubr.f32.mxu0 0.0
    %290 = vmatmul.mubr.f32.gmra.mrb[0].mxu0 %v220
    %v291 = vpop.f32.mrb[0].mxu0
    %v292 = vadd.f32 0.0, %v291
    %v293 = vpop.f32.mrb[0].mxu0
    %294 = vdwg.mxu0
    %v295 = vxor.u32 %v292, 2147483648
    %v296 = vmul.f32 %v295, 1.442695
    %v297 = vpow.pop %v296
    %v298 = vadd.f32 %v297, 1.0
    %v299 = vrcp.pop %v298
    %v300 = vmul.f32 1.0, %v299
    %v303 = vlaneseq
    %v304 = vshrl.u32 %v303, 7
    %v305 = vsub.s32 %v130, %v304
    %v306 = vrot.slane %v122, %v305
    %v307 = vlaneseq
    %v308 = vshrl.u32 %v307, 7
    %v309 = vsub.s32 %v130, %v308
    %v310 = vrot.slane %v123, %v309
    %v311 = vsel %vm139, %v310, %v306
    %v312 = vsel %vm141, %v311, 0
    %314 = vmatprep.subr.mxu0 0.0
    %315 = vmatpush1.xpose.msra.mxu0 %v145
    %316 = vmatprep.subr.mxu0 0.0
    %317 = vmatpush1.xpose.msra.mxu0 0.0
    %318 = vmatprep.subr.mxu0 0.0
    %319 = vmatpush1.xpose.msra.mxu0 0.0
    %320 = vmatprep.subr.mxu0 0.0
    %321 = vmatpush1.xpose.msra.mxu0 0.0
    %322 = vmatprep.subr.mxu0 0.0
    %323 = vmatpush1.xpose.msra.mxu0 0.0
    %324 = vmatprep.subr.mxu0 0.0
    %325 = vmatpush1.xpose.msra.mxu0 0.0
    %326 = vmatprep.subr.mxu0 0.0
    %327 = vmatpush1.xpose.msra.mxu0 0.0
    %328 = vmatprep.subr.mxu0 0.0
    %329 = vmatpush1.xpose.msra.mxu0 0.0
    %330 = vmatprep.subr.mxu0 0.0
    %331 = vmatpush1.xpose.msra.mxu0 0.0
    %332 = vmatprep.subr.mxu0 0.0
    %333 = vmatpush1.xpose.msra.mxu0 0.0
    %334 = vmatprep.subr.mxu0 0.0
    %335 = vmatpush1.xpose.msra.mxu0 0.0
    %336 = vmatprep.subr.mxu0 0.0
    %337 = vmatpush1.xpose.msra.mxu0 0.0
    %338 = vmatprep.subr.mxu0 0.0
    %339 = vmatpush1.xpose.msra.mxu0 0.0
    %340 = vmatprep.subr.mxu0 0.0
    %341 = vmatpush1.xpose.msra.mxu0 0.0
    %342 = vmatprep.subr.mxu0 0.0
    %343 = vmatpush1.xpose.msra.mxu0 0.0
    %344 = vmatprep.subr.mxu0 0.0
    %345 = vmatpush1.xpose.msra.mxu0 0.0
    %346 = vmatprep.subr.mxu0 0.0
    %347 = vmatpush1.xpose.msra.mxu0 0.0
    %348 = vmatprep.subr.mxu0 0.0
    %349 = vmatpush1.xpose.msra.mxu0 0.0
    %350 = vmatprep.subr.mxu0 0.0
    %351 = vmatpush1.xpose.msra.mxu0 0.0
    %352 = vmatprep.subr.mxu0 0.0
    %353 = vmatpush1.xpose.msra.mxu0 0.0
    %354 = vmatprep.subr.mxu0 0.0
    %355 = vmatpush1.xpose.msra.mxu0 0.0
    %356 = vmatprep.subr.mxu0 0.0
    %357 = vmatpush1.xpose.msra.mxu0 0.0
    %358 = vmatprep.subr.mxu0 0.0
    %359 = vmatpush1.xpose.msra.mxu0 0.0
    %360 = vmatprep.subr.mxu0 0.0
    %361 = vmatpush1.xpose.msra.mxu0 0.0
    %362 = vmatprep.subr.mxu0 0.0
    %363 = vmatpush1.xpose.msra.mxu0 0.0
    %364 = vmatprep.subr.mxu0 0.0
    %365 = vmatpush1.xpose.msra.mxu0 0.0
    %366 = vmatprep.subr.mxu0 0.0
    %367 = vmatpush1.xpose.msra.mxu0 0.0
    %368 = vmatprep.subr.mxu0 0.0
    %369 = vmatpush1.xpose.msra.mxu0 0.0
    %370 = vmatprep.subr.mxu0 0.0
    %371 = vmatpush1.xpose.msra.mxu0 0.0
    %372 = vmatprep.subr.mxu0 0.0
    %373 = vmatpush1.xpose.msra.mxu0 0.0
    %374 = vmatprep.subr.mxu0 0.0
    %375 = vmatpush1.xpose.msra.mxu0 0.0
    %376 = vmatprep.subr.mxu0 0.0
    %377 = vmatpush1.xpose.msra.mxu0 0.0
    %378 = vmatprep.mubr.f32.mxu0 0.0
    %379 = vmatmul.mubr.f32.gmra.mrb[0].mxu0 %v312
    %v380 = vpop.f32.mrb[0].mxu0
    %v381 = vadd.f32 0.0, %v380
    %v382 = vpop.f32.mrb[0].mxu0
    %383 = vdwg.mxu0
    %v384 = vmax.f32 %v381, 0.0
    %v386 = vsel %vm218, %v384, 0
    %388 = vmatprep.subr.mxu0 0.0
    %389 = vmatpush1.xpose.msra.mxu0 %v223
    %390 = vmatprep.subr.mxu0 0.0
    %391 = vmatpush1.xpose.msra.mxu0 0.0
    %392 = vmatprep.subr.mxu0 0.0
    %393 = vmatpush1.xpose.msra.mxu0 0.0
    %394 = vmatprep.subr.mxu0 0.0
    %395 = vmatpush1.xpose.msra.mxu0 0.0
    %396 = vmatprep.subr.mxu0 0.0
    %397 = vmatpush1.xpose.msra.mxu0 0.0
    %398 = vmatprep.subr.mxu0 0.0
    %399 = vmatpush1.xpose.msra.mxu0 0.0
    %400 = vmatprep.subr.mxu0 0.0
    %401 = vmatpush1.xpose.msra.mxu0 0.0
    %402 = vmatprep.subr.mxu0 0.0
    %403 = vmatpush1.xpose.msra.mxu0 0.0
    %404 = vmatprep.subr.mxu0 0.0
    %405 = vmatpush1.xpose.msra.mxu0 0.0
    %406 = vmatprep.subr.mxu0 0.0
    %407 = vmatpush1.xpose.msra.mxu0 0.0
    %408 = vmatprep.subr.mxu0 0.0
    %409 = vmatpush1.xpose.msra.mxu0 0.0
    %410 = vmatprep.subr.mxu0 0.0
    %411 = vmatpush1.xpose.msra.mxu0 0.0
    %412 = vmatprep.subr.mxu0 0.0
    %413 = vmatpush1.xpose.msra.mxu0 0.0
    %414 = vmatprep.subr.mxu0 0.0
    %415 = vmatpush1.xpose.msra.mxu0 0.0
    %416 = vmatprep.subr.mxu0 0.0
    %417 = vmatpush1.xpose.msra.mxu0 0.0
    %418 = vmatprep.subr.mxu0 0.0
    %419 = vmatpush1.xpose.msra.mxu0 0.0
    %420 = vmatprep.subr.mxu0 0.0
    %421 = vmatpush1.xpose.msra.mxu0 0.0
    %422 = vmatprep.subr.mxu0 0.0
    %423 = vmatpush1.xpose.msra.mxu0 0.0
    %424 = vmatprep.subr.mxu0 0.0
    %425 = vmatpush1.xpose.msra.mxu0 0.0
    %426 = vmatprep.subr.mxu0 0.0
    %427 = vmatpush1.xpose.msra.mxu0 0.0
    %428 = vmatprep.subr.mxu0 0.0
    %429 = vmatpush1.xpose.msra.mxu0 0.0
    %430 = vmatprep.subr.mxu0 0.0
    %431 = vmatpush1.xpose.msra.mxu0 0.0
    %432 = vmatprep.subr.mxu0 0.0
    %433 = vmatpush1.xpose.msra.mxu0 0.0
    %434 = vmatprep.subr.mxu0 0.0
    %435 = vmatpush1.xpose.msra.mxu0 0.0
    %436 = vmatprep.subr.mxu0 0.0
    %437 = vmatpush1.xpose.msra.mxu0 0.0
    %438 = vmatprep.subr.mxu0 0.0
    %439 = vmatpush1.xpose.msra.mxu0 0.0
    %440 = vmatprep.subr.mxu0 0.0
    %441 = vmatpush1.xpose.msra.mxu0 0.0
    %442 = vmatprep.subr.mxu0 0.0
    %443 = vmatpush1.xpose.msra.mxu0 0.0
    %444 = vmatprep.subr.mxu0 0.0
    %445 = vmatpush1.xpose.msra.mxu0 0.0
    %446 = vmatprep.subr.mxu0 0.0
    %447 = vmatpush1.xpose.msra.mxu0 0.0
    %448 = vmatprep.subr.mxu0 0.0
    %449 = vmatpush1.xpose.msra.mxu0 0.0
    %450 = vmatprep.subr.mxu0 0.0
    %451 = vmatpush1.xpose.msra.mxu0 0.0
    %452 = vmatprep.mubr.f32.mxu0 0.0
    %453 = vmatmul.mubr.f32.gmra.mrb[0].mxu0 %v386
    %v454 = vpop.f32.mrb[0].mxu0
    %v455 = vadd.f32 0.0, %v454
    %v456 = vpop.f32.mrb[0].mxu0
    %457 = vdwg.mxu0
    %v458 = vxor.u32 %v455, 2147483648
    %v459 = vmul.f32 %v458, 1.442695
    %v460 = vpow.pop %v459
    %v461 = vadd.f32 %v460, 1.0
    %v462 = vrcp.pop %v461
    %v463 = vmul.f32 1.0, %v462
    %v464 = vadd.f32 %v300, %v463
    %v465 = vxor.u32 %v464, 2147483648
    %v466 = vmul.f32 %v465, 1.442695
    %v467 = vpow.pop %v466
    %v468 = vadd.f32 %v467, 1.0
    %v469 = vrcp.pop %v468
    %v470 = vmul.f32 1.0, %v469
    %v471 = vlaneseq
    %v472 = vshrl.u32 %v471, 7
    %v473 = vsub.s32 0, %v472
    %v474 = vrot.slane %v470, %v473
    %476 = vbcast.lane.b32.xlu0 %v474, 256
    %v477 = vpop.permute.xlu0 %476
    %v478 = vlaneseq
    %v479 = vshrl.u32 %v478, 7
    %v480 = vsub.s32 1, %v479
    %v481 = vrot.slane %v470, %v480
    %483 = vbcast.lane.b32.xlu0 %v481, 256
    %v484 = vpop.permute.xlu0 %483
    %v488 = vunpack.c.l.s4 839922192
    %v489 = vunpack.c.0.s8 %v488
    %v490 = vlaneseq
    %v491 = vshrl.u32 %v490, 7
    %v492 = vsub.s32 %v489, %v491
    %v493 = vrot.slane %v477, %v492
    %v495 = vunpack.c.l.s4 839922192
    %v496 = vunpack.c.0.s8 %v495
    %v497 = vlaneseq
    %v498 = vshrl.u32 %v497, 7
    %v499 = vsub.s32 %v496, %v498
    %v500 = vrot.slane %v484, %v499
    %v503 = vmul.f32 %v41, %v493
    %v504 = vmul.f32 %v42, %v500
    %505 = vst [vmem:[#allocation7] sm:$0xff] %v503
    %506 = vst [vmem:[#allocation7 + $0x8] sm:$0xff] %v504
    // Predicated region
    $region22: #{tpu_custom_call.1} parent=1 // pred_check
      _
    $region23: #{tpu_custom_call.1} parent=1 // pred_check_branch
      %508 = sbr.rel (0) target = $region25
    $region24: #{tpu_custom_call.1} parent=1 // pred_region
      %s510 = ssub.s32 256, 256
      %511 = vsyncadd [#allocation4], %s510
      %s512 = sshll.u32 [#allocation7], 4
      %s513 = int_to_ptr.vmem [resolvable:$true] %s512
      %518 = dma.vmem_to_hbm [thread:$0]  %s513, 256, %s3, [#allocation4], 128, 128, 8
    $region25: #{tpu_custom_call.1} parent=1 // pred_fallthru
      _
    // Predicated region
    $region26: #{tpu_custom_call.1} parent=1 // pred_check
      _
    $region27: #{tpu_custom_call.1} parent=1 // pred_check_branch
      %520 = sbr.rel (0) target = $region29
    $region28: #{tpu_custom_call.1} parent=1 // pred_region
      %521 = dma.done [#allocation4], 256
    $region29: #{tpu_custom_call.1} parent=1 // pred_fallthru
      _
    %522 = vsyncpa [#allocation3], 1
    %523 = vsyncpa [#allocation6], 1
    %524 = vsyncpa [#allocation4], 1

</llo_original>
